<compile_context>
chip_gen: v7x
topology: tpu7x:2x2x1
jax: 0.10.0
libtpu: 0.0.40
codegen_flags: <defaults>
</compile_context>

<pallas_src>
import functools

import jax
import jax.numpy as jnp
from jax import lax
from jax.experimental import pallas as pl
from jax.experimental.pallas import tpu as pltpu


def _round_up(x, m):
    return ((x + m - 1) // m) * m


def _linear_kernel(x_ref, w_ref, b_ref, o_ref, acc_ref):
    # x_ref:  (tm, tk)  tile of flattened (batch*time) rows
    # w_ref:  (tn, tk)  tile of the PyTorch-layout weight (out, in)
    # b_ref:  (1, tn)   bias tile
    # o_ref:  (tm, tn)  output tile
    # acc_ref:(tm, tn)  f32 accumulator scratch (persists across the K axis)
    k = pl.program_id(2)

    @pl.when(k == 0)
    def _():
        acc_ref[...] = jnp.zeros_like(acc_ref)

    # Contract x's K (axis 1) with weight's K (axis 1): x @ W^T on the MXU,
    # no wrapper-side transpose needed.
    acc_ref[...] += lax.dot_general(
        x_ref[...], w_ref[...],
        dimension_numbers=(((1,), (1,)), ((), ())),
        preferred_element_type=jnp.float32)

    @pl.when(k == pl.num_programs(2) - 1)
    def _():
        o_ref[...] = (acc_ref[...] + b_ref[...]).astype(o_ref.dtype)


@functools.partial(jax.jit, static_argnames=("tm_cap", "tn_cap", "tk_cap"))
def time_distributed_linear(x, weight, bias, *, tm_cap=512, tn_cap=256,
                            tk_cap=512):
    """TimeDistributed(nn.Linear) forward.

    x:      (batch, time, ..., in_features)
    weight: (out_features, in_features)   -- PyTorch nn.Linear convention
    bias:   (out_features,)
    returns x.shape[:-1] + (out_features,)
    """
    if x.ndim <= 2:
        raise RuntimeError(f"No dimension to distribute: {x.shape}")

    lead_shape = x.shape[:-1]          # (batch, time, [rest...])
    in_features = x.shape[-1]
    out_features = weight.shape[0]

    # TimeDistributed._reshape_tensor: squash the leading dims (Linear only
    # touches the last dim, so collapsing all leading dims is equivalent).
    x2d = x.reshape(-1, in_features)
    m, k_dim, n_dim = x2d.shape[0], in_features, out_features

    # --- tile selection -----------------------------------------------------
    sublane = 16 if x.dtype in (jnp.bfloat16,) else 8
    tm = min(tm_cap, _round_up(m, sublane))
    tn = min(tn_cap, _round_up(n_dim, 128))
    if k_dim <= max(tk_cap, 1024):
        tk = k_dim                      # full-K block (allowed: equals array dim)
    else:
        tk = tk_cap                     # tile K, accumulate across the K axis

    m_pad = _round_up(m, tm)
    n_pad = _round_up(n_dim, tn)
    k_pad = _round_up(k_dim, tk)

    # --- pad to tile multiples (zeros do not change the matmul result) ------
    if (m_pad, k_pad) != (m, k_dim):
        x2d = jnp.pad(x2d, ((0, m_pad - m), (0, k_pad - k_dim)))
    w = weight
    if (n_pad, k_pad) != (n_dim, k_dim):
        w = jnp.pad(w, ((0, n_pad - n_dim), (0, k_pad - k_dim)))
    b2d = bias.reshape(1, n_dim)
    if n_pad != n_dim:
        b2d = jnp.pad(b2d, ((0, 0), (0, n_pad - n_dim)))

    grid = (m_pad // tm, n_pad // tn, k_pad // tk)
    itemsize = jnp.dtype(x.dtype).itemsize
    cost = pl.CostEstimate(
        flops=2 * m * k_dim * n_dim,
        transcendentals=0,
        bytes_accessed=(m * k_dim + n_dim * k_dim + n_dim) * itemsize
                       + m * n_dim * itemsize)

    y2d = pl.pallas_call(
        _linear_kernel,
        out_shape=jax.ShapeDtypeStruct((m_pad, n_pad), x.dtype),
        grid_spec=pltpu.PrefetchScalarGridSpec(
            num_scalar_prefetch=0,
            grid=grid,
            in_specs=[
                pl.BlockSpec((tm, tk), lambda i, j, kk: (i, kk)),
                pl.BlockSpec((tn, tk), lambda i, j, kk: (j, kk)),
                pl.BlockSpec((1, tn), lambda i, j, kk: (0, j)),
            ],
            out_specs=pl.BlockSpec((tm, tn), lambda i, j, kk: (i, j)),
            scratch_shapes=[pltpu.VMEM((tm, tn), jnp.float32)],
        ),
        compiler_params=pltpu.CompilerParams(
            dimension_semantics=("parallel", "parallel", "arbitrary")),
        cost_estimate=cost,
    )(x2d, w, b2d)

    # Drop padding, then un-squash:
    # new_size = inputs[-1].shape[:2] + module_output.shape[1:]
    y2d = y2d[:m, :n_dim]
    return y2d.reshape(lead_shape + (out_features,))


if __name__ == "__main__":
    # Small shapes: batch=2, time=8, in_features=32, out_features=64.
    batch, time, in_features, out_features = 2, 8, 32, 64

    key = jax.random.PRNGKey(0)
    kx, kw, kb = jax.random.split(key, 3)

    x = jax.random.normal(kx, (batch, time, in_features), dtype=jnp.float32)
    # nn.Linear-shaped synthetic parameters: W (out, in), b (out,).
    bound = 1.0 / (in_features ** 0.5)
    weight = jax.random.uniform(
        kw, (out_features, in_features), minval=-bound, maxval=bound,
        dtype=jnp.float32)
    bias = jax.random.uniform(
        kb, (out_features,), minval=-bound, maxval=bound, dtype=jnp.float32)

    out = time_distributed_linear(x, weight, bias)
    out = jax.block_until_ready(out)

    # Reference check against plain JAX (same semantics as the PyTorch forward).
    ref = (x.reshape(-1, in_features) @ weight.T + bias).reshape(
        batch, time, out_features)
    assert out.shape == (batch, time, out_features)
    assert jnp.allclose(out, ref, atol=1e-5, rtol=1e-5)

    print("KERNEL_OK")
</pallas_src>

<mosaic_0001>
module attributes {stable_mosaic.version = 11 : i64} {
  func.func @_linear_kernel(%arg0: i32, %arg1: i32, %arg2: i32, %arg3: memref<16x32xf32, #tpu.memory_space<vmem>>, %arg4: memref<128x32xf32, #tpu.memory_space<vmem>>, %arg5: memref<1x128xf32, #tpu.memory_space<vmem>>, %arg6: memref<16x128xf32, #tpu.memory_space<vmem>>, %arg7: memref<16x128xf32, #tpu.memory_space<vmem>>) attributes {dimension_semantics = [#tpu.dimension_semantics<parallel>, #tpu.dimension_semantics<parallel>, #tpu.dimension_semantics<arbitrary>], iteration_bounds = array<i64: 1, 1, 1>, scalar_prefetch = 0 : i64, scratch_operands = 1 : i64, tpu.core_type = #tpu.core_type<tc>, window_params = [{transform_indices = @transform_0, window_bounds = array<i64: 16, 32>}, {transform_indices = @transform_1, window_bounds = array<i64: 128, 32>}, {transform_indices = @transform_2, window_bounds = array<i64: 1, 128>}, {transform_indices = @transform_3, window_bounds = array<i64: 16, 128>}]} {
    %c0_i32 = arith.constant 0 : i32
    %0 = arith.cmpi eq, %arg2, %c0_i32 : i32
    %1 = arith.extui %0 : i1 to i32
    %c0_i32_0 = arith.constant 0 : i32
    %2 = arith.cmpi ne, %1, %c0_i32_0 : i32
    scf.if %2 {
      %cst_10 = arith.constant 0.000000e+00 : f32
      %12 = vector.broadcast %cst_10 : f32 to vector<16x128xf32>
      %c0_11 = arith.constant 0 : index
      %c0_12 = arith.constant 0 : index
      %13 = vector.load %arg7[%c0_11, %c0_12] : memref<16x128xf32, #tpu.memory_space<vmem>>, vector<16x128xf32>
      tpu.vector_store %arg7[%c0_11, %c0_12], %12 {strides = array<i32>} : memref<16x128xf32, #tpu.memory_space<vmem>>, vector<16x128xf32>,
    } else {
    }
    %c0 = arith.constant 0 : index
    %c0_1 = arith.constant 0 : index
    %3 = vector.load %arg7[%c0, %c0_1] : memref<16x128xf32, #tpu.memory_space<vmem>>, vector<16x128xf32>
    %c0_2 = arith.constant 0 : index
    %c0_3 = arith.constant 0 : index
    %4 = vector.load %arg3[%c0_2, %c0_3] : memref<16x32xf32, #tpu.memory_space<vmem>>, vector<16x32xf32>
    %c0_4 = arith.constant 0 : index
    %c0_5 = arith.constant 0 : index
    %5 = vector.load %arg4[%c0_4, %c0_5] : memref<128x32xf32, #tpu.memory_space<vmem>>, vector<128x32xf32>
    %cst = arith.constant dense<0.000000e+00> : vector<16x128xf32>
    %6 = tpu.matmul %4, %5, %cst {dimension_numbers = #tpu.dot_dimension_numbers<[1], [1], [0], [0], [0, 0, 1, 0], [], []>} : vector<16x32xf32>, vector<128x32xf32>, vector<16x128xf32> -> vector<16x128xf32>
    %7 = arith.addf %3, %6 : vector<16x128xf32>
    %c0_6 = arith.constant 0 : index
    %c0_7 = arith.constant 0 : index
    %8 = vector.load %arg7[%c0_6, %c0_7] : memref<16x128xf32, #tpu.memory_space<vmem>>, vector<16x128xf32>
    tpu.vector_store %arg7[%c0_6, %c0_7], %7 {strides = array<i32>} : memref<16x128xf32, #tpu.memory_space<vmem>>, vector<16x128xf32>,
    %c0_i32_8 = arith.constant 0 : i32
    %9 = arith.cmpi eq, %arg2, %c0_i32_8 : i32
    %10 = arith.extui %9 : i1 to i32
    %c0_i32_9 = arith.constant 0 : i32
    %11 = arith.cmpi ne, %10, %c0_i32_9 : i32
    scf.if %11 {
      %c0_10 = arith.constant 0 : index
      %c0_11 = arith.constant 0 : index
      %12 = vector.load %arg7[%c0_10, %c0_11] : memref<16x128xf32, #tpu.memory_space<vmem>>, vector<16x128xf32>
      %c0_12 = arith.constant 0 : index
      %c0_13 = arith.constant 0 : index
      %13 = vector.load %arg5[%c0_12, %c0_13] : memref<1x128xf32, #tpu.memory_space<vmem>>, vector<1x128xf32>
      %14 = vector.broadcast %13 : vector<1x128xf32> to vector<16x128xf32>
      %15 = arith.addf %12, %14 : vector<16x128xf32>
      %c0_14 = arith.constant 0 : index
      %c0_15 = arith.constant 0 : index
      %16 = vector.load %arg6[%c0_14, %c0_15] : memref<16x128xf32, #tpu.memory_space<vmem>>, vector<16x128xf32>
      tpu.vector_store %arg6[%c0_14, %c0_15], %15 {strides = array<i32>} : memref<16x128xf32, #tpu.memory_space<vmem>>, vector<16x128xf32>,
    } else {
    }
    return
  }
  func.func @transform_0(%arg0: i32, %arg1: i32, %arg2: i32) -> (i32, i32) {
    %c0_i32 = arith.constant 0 : i32
    return %arg0, %arg2 : i32, i32
  }
  func.func @transform_1(%arg0: i32, %arg1: i32, %arg2: i32) -> (i32, i32) {
    %c0_i32 = arith.constant 0 : i32
    return %arg1, %arg2 : i32, i32
  }
  func.func @transform_2(%arg0: i32, %arg1: i32, %arg2: i32) -> (i32, i32) {
    %c0_i32 = arith.constant 0 : i32
    %c0_i32_0 = arith.constant 0 : i32
    return %c0_i32, %arg1 : i32, i32
  }
  func.func @transform_3(%arg0: i32, %arg1: i32, %arg2: i32) -> (i32, i32) {
    %c0_i32 = arith.constant 0 : i32
    return %arg0, %arg1 : i32, i32
  }
}

</mosaic_0001>

<llo_original>
// kernel: time_distributed_linear.1
$region0: #{time_distributed_linear.1}
  #allocation0 [shape = 'u32[]', space=smem, size = 0x4, offset = 0x4, fixed_abs, tag = 'smem constant byte address 0x4 - core index']
  #allocation1 [shape = 'u32[144,128]{1,0:T(1,128)}', space=vmem, size = 0x12000, scoped, tag = 'internal scratch']
  #allocation2 [shape = 'f32[16,128]{1,0:T(8,128)}', space=vmem, size = 0x2000, scoped, tag = 'scratch operand']
  %s0 = inlined_call_operand.vmem [shape: f32[16,32], index: 0, kind: input, shape index: {}]
  %s1 = inlined_call_operand.vmem [shape: f32[128,32], index: 1, kind: input, shape index: {}]
  %s2 = inlined_call_operand.vmem [shape: f32[1,128], index: 2, kind: input, shape index: {}]
  %s3 = inlined_call_operand.vmem [shape: f32[16,128], index: 3, kind: output, shape index: {}]
  %s4 = sld [smem:[#allocation0]]
  $region30: #{time_distributed_linear.1} parent=0
    _
  %s6 = ssub.s32 1, %s4
  %s7 = scalar_select 0, %s6, %s4
  // Predicated region
  $region2: #{time_distributed_linear.1} parent=0 // pred_check
    _
  $region3: #{time_distributed_linear.1} parent=0 // pred_check_branch
    %9 = sbr.rel (0) target = $region5
  $region4: #{time_distributed_linear.1} parent=0 // pred_region
    _
  $region5: #{time_distributed_linear.1} parent=0 // pred_fallthru
    _
  // Predicated region
  $region6: #{time_distributed_linear.1} parent=0 // pred_check
    _
  $region7: #{time_distributed_linear.1} parent=0 // pred_check_branch
    %11 = sbr.rel (0) target = $region9
  $region8: #{time_distributed_linear.1} parent=0 // pred_region
    _
  $region9: #{time_distributed_linear.1} parent=0 // pred_fallthru
    _
  // Predicated region
  $region10: #{time_distributed_linear.1} parent=0 // pred_check
    _
  $region11: #{time_distributed_linear.1} parent=0 // pred_check_branch
    %13 = sbr.rel (0) target = $region13
  $region12: #{time_distributed_linear.1} parent=0 // pred_region
    _
  $region13: #{time_distributed_linear.1} parent=0 // pred_fallthru
    _
  %p14 = scmp.eq.s32.totalorder 0, 0
  // Predicated region
  $region14: #{time_distributed_linear.1} parent=0 // pred_check
    %p15 = pneg %p14
  $region15: #{time_distributed_linear.1} parent=0 // pred_check_branch
    %17 = sbr.rel (%p15) target = $region17
  $region16: #{time_distributed_linear.1} parent=0 // pred_region
    %18 = vst [vmem:[#allocation2] sm:$0xff] 0.0
    %19 = vst [vmem:[#allocation2 + $0x8] sm:$0xff] 0.0
  $region17: #{time_distributed_linear.1} parent=0 // pred_fallthru
    _
  %v20 = vld [vmem:[#allocation2] sm:$0xff]
  %v21 = vld [vmem:[#allocation2 + $0x8] sm:$0xff]
  %v22 = vld [vmem:[%s0] sm:$0xff]
  %v23 = vld [vmem:[%s0 + $0x8] sm:$0xff]
  %v24 = vld [vmem:[%s1] sm:$0xff]
  %v25 = vld [vmem:[%s1 + $0x8] sm:$0xff]
  %v26 = vld [vmem:[%s1 + $0x10] sm:$0xff]
  %v27 = vld [vmem:[%s1 + $0x18] sm:$0xff]
  %v28 = vld [vmem:[%s1 + $0x20] sm:$0xff]
  %v29 = vld [vmem:[%s1 + $0x28] sm:$0xff]
  %v30 = vld [vmem:[%s1 + $0x30] sm:$0xff]
  %v31 = vld [vmem:[%s1 + $0x38] sm:$0xff]
  %v32 = vld [vmem:[%s1 + $0x40] sm:$0xff]
  %v33 = vld [vmem:[%s1 + $0x48] sm:$0xff]
  %v34 = vld [vmem:[%s1 + $0x50] sm:$0xff]
  %v35 = vld [vmem:[%s1 + $0x58] sm:$0xff]
  %v36 = vld [vmem:[%s1 + $0x60] sm:$0xff]
  %v37 = vld [vmem:[%s1 + $0x68] sm:$0xff]
  %v38 = vld [vmem:[%s1 + $0x70] sm:$0xff]
  %v39 = vld [vmem:[%s1 + $0x78] sm:$0xff]
  %vm40 = vcmask 261120
  %v42 = vsel %vm40, %v22, 0
  %v45 = vsel %vm40, %v23, 0
  %v48 = vsel %vm40, %v24, 0
  %v51 = vsel %vm40, %v25, 0
  %v54 = vsel %vm40, %v26, 0
  %v57 = vsel %vm40, %v27, 0
  %v60 = vsel %vm40, %v28, 0
  %v63 = vsel %vm40, %v29, 0
  %v66 = vsel %vm40, %v30, 0
  %v69 = vsel %vm40, %v31, 0
  %v72 = vsel %vm40, %v32, 0
  %v75 = vsel %vm40, %v33, 0
  %v78 = vsel %vm40, %v34, 0
  %v81 = vsel %vm40, %v35, 0
  %v84 = vsel %vm40, %v36, 0
  %v87 = vsel %vm40, %v37, 0
  %v90 = vsel %vm40, %v38, 0
  %v93 = vsel %vm40, %v39, 0
  %95 = vmatprep.subr.mxu0 0.0
  %96 = vmatpush1.xpose.msra.mxu0 %v48
  %97 = vmatprep.subr.mxu0 0.0
  %98 = vmatpush1.xpose.msra.mxu0 %v51
  %99 = vmatprep.subr.mxu0 0.0
  %100 = vmatpush1.xpose.msra.mxu0 %v54
  %101 = vmatprep.subr.mxu0 0.0
  %102 = vmatpush1.xpose.msra.mxu0 %v57
  %103 = vmatprep.subr.mxu0 0.0
  %104 = vmatpush1.xpose.msra.mxu0 %v60
  %105 = vmatprep.subr.mxu0 0.0
  %106 = vmatpush1.xpose.msra.mxu0 %v63
  %107 = vmatprep.subr.mxu0 0.0
  %108 = vmatpush1.xpose.msra.mxu0 %v66
  %109 = vmatprep.subr.mxu0 0.0
  %110 = vmatpush1.xpose.msra.mxu0 %v69
  %111 = vmatprep.subr.mxu0 0.0
  %112 = vmatpush1.xpose.msra.mxu0 %v72
  %113 = vmatprep.subr.mxu0 0.0
  %114 = vmatpush1.xpose.msra.mxu0 %v75
  %115 = vmatprep.subr.mxu0 0.0
  %116 = vmatpush1.xpose.msra.mxu0 %v78
  %117 = vmatprep.subr.mxu0 0.0
  %118 = vmatpush1.xpose.msra.mxu0 %v81
  %119 = vmatprep.subr.mxu0 0.0
  %120 = vmatpush1.xpose.msra.mxu0 %v84
  %121 = vmatprep.subr.mxu0 0.0
  %122 = vmatpush1.xpose.msra.mxu0 %v87
  %123 = vmatprep.subr.mxu0 0.0
  %124 = vmatpush1.xpose.msra.mxu0 %v90
  %125 = vmatprep.subr.mxu0 0.0
  %126 = vmatpush1.xpose.msra.mxu0 %v93
  %127 = vmatprep.subr.mxu0 0.0
  %128 = vmatpush1.xpose.msra.mxu0 0.0
  %129 = vmatprep.subr.mxu0 0.0
  %130 = vmatpush1.xpose.msra.mxu0 0.0
  %131 = vmatprep.subr.mxu0 0.0
  %132 = vmatpush1.xpose.msra.mxu0 0.0
  %133 = vmatprep.subr.mxu0 0.0
  %134 = vmatpush1.xpose.msra.mxu0 0.0
  %135 = vmatprep.subr.mxu0 0.0
  %136 = vmatpush1.xpose.msra.mxu0 0.0
  %137 = vmatprep.subr.mxu0 0.0
  %138 = vmatpush1.xpose.msra.mxu0 0.0
  %139 = vmatprep.subr.mxu0 0.0
  %140 = vmatpush1.xpose.msra.mxu0 0.0
  %141 = vmatprep.subr.mxu0 0.0
  %142 = vmatpush1.xpose.msra.mxu0 0.0
  %143 = vmatprep.subr.mxu0 0.0
  %144 = vmatpush1.xpose.msra.mxu0 0.0
  %145 = vmatprep.subr.mxu0 0.0
  %146 = vmatpush1.xpose.msra.mxu0 0.0
  %147 = vmatprep.subr.mxu0 0.0
  %148 = vmatpush1.xpose.msra.mxu0 0.0
  %149 = vmatprep.subr.mxu0 0.0
  %150 = vmatpush1.xpose.msra.mxu0 0.0
  %151 = vmatprep.subr.mxu0 0.0
  %152 = vmatpush1.xpose.msra.mxu0 0.0
  %153 = vmatprep.subr.mxu0 0.0
  %154 = vmatpush1.xpose.msra.mxu0 0.0
  %155 = vmatprep.subr.mxu0 0.0
  %156 = vmatpush1.xpose.msra.mxu0 0.0
  %157 = vmatprep.subr.mxu0 0.0
  %158 = vmatpush1.xpose.msra.mxu0 0.0
  %159 = vmatprep.mubr.f32.mxu0 0.0
  %160 = vmatmul.mubr.f32.gmra.mrb[0].mxu0 %v42
  %v161 = vpop.f32.mrb[0].mxu0
  %v162 = vadd.f32 0.0, %v161
  %v163 = vpop.f32.mrb[0].mxu0
  %164 = vmatprep.mubr.f32.mxu0 0.0
  %165 = vmatmul.mubr.f32.gmra.mrb[0].mxu0 %v45
  %v166 = vpop.f32.mrb[0].mxu0
  %v167 = vadd.f32 0.0, %v166
  %v168 = vpop.f32.mrb[0].mxu0
  %169 = vdwg.mxu0
  %v170 = vadd.f32 %v20, %v162
  %v171 = vadd.f32 %v21, %v167
  %172 = vst [vmem:[#allocation2] sm:$0xff] %v170
  %173 = vst [vmem:[#allocation2 + $0x8] sm:$0xff] %v171
  // Predicated region
  $region18: #{time_distributed_linear.1} parent=0 // pred_check
    %p174 = pneg %p14
  $region19: #{time_distributed_linear.1} parent=0 // pred_check_branch
    %176 = sbr.rel (%p174) target = $region21
  $region20: #{time_distributed_linear.1} parent=0 // pred_region
    %v177 = vld [vmem:[#allocation2] sm:$0xff]
    %v178 = vld [vmem:[#allocation2 + $0x8] sm:$0xff]
    %v179 = vld [vmem:[%s2] sm:$0x1]
    %v181 = vlaneseq
    %v182 = vshrl.u32 %v181, 7
    %v183 = vsub.s32 0, %v182
    %v184 = vrot.slane %v179, %v183
    %v186 = vadd.f32 %v177, %v184
    %v187 = vadd.f32 %v178, %v184
    %188 = vst [vmem:[%s3] sm:$0xff] %v186
    %189 = vst [vmem:[%s3 + $0x8] sm:$0xff] %v187
  $region21: #{time_distributed_linear.1} parent=0 // pred_fallthru
    _
  // Predicated region
  $region22: #{time_distributed_linear.1} parent=0 // pred_check
    _
  $region23: #{time_distributed_linear.1} parent=0 // pred_check_branch
    %191 = sbr.rel (0) target = $region25
  $region24: #{time_distributed_linear.1} parent=0 // pred_region
    _
  $region25: #{time_distributed_linear.1} parent=0 // pred_fallthru
    _
  // Predicated region
  $region26: #{time_distributed_linear.1} parent=0 // pred_check
    _
  $region27: #{time_distributed_linear.1} parent=0 // pred_check_branch
    %193 = sbr.rel (0) target = $region29
  $region28: #{time_distributed_linear.1} parent=0 // pred_region
    _
  $region29: #{time_distributed_linear.1} parent=0 // pred_fallthru
    _

</llo_original>
